<compile_context>
chip_gen: v7x
topology: tpu7x:2x2x1
jax: 0.10.0
libtpu: 0.0.40
codegen_flags: <defaults>
</compile_context>

<pallas_src>
import jax
import jax.numpy as jnp
from jax import lax
from jax.experimental import pallas as pl
from jax.experimental.pallas import tpu as pltpu


def _triplet_partials_kernel(img_ref, txt_pair_ref, txt_t_ref, yy_ref,
                             pos_ref, rmin_ref, cmin_ref):
    """One row block: paired d^2, per-row off-diag min d^2, per-col min d^2."""
    i = pl.program_id(0)
    tm = img_ref.shape[0]
    B = txt_t_ref.shape[1]
    row0 = i * tm

    xb = img_ref[...]                                      # (tm, D), native dtype
    xb32 = xb.astype(jnp.float32)

    # Positive (paired) squared distances: O(tm*D) VPU work.
    diff = xb32 - txt_pair_ref[...].astype(jnp.float32)
    pos_ref[0] = jnp.sum(diff * diff, axis=-1, keepdims=True)            # (tm, 1)

    # Cross squared distances via ||x||^2 + ||y||^2 - 2 x.y; canonical
    # (tm, D) @ (D, B) MXU matmul accumulated in f32.
    xx = jnp.sum(xb32 * xb32, axis=-1, keepdims=True)                    # (tm, 1)
    xy = jnp.dot(xb, txt_t_ref[...], preferred_element_type=jnp.float32)  # (tm, B)
    d2 = xx + yy_ref[...] - 2.0 * xy                                     # (tm, B) f32

    # Mask the global diagonal; its "+margin" candidate is re-added
    # algebraically in the wrapper's hinge.
    row_ids = lax.broadcasted_iota(jnp.int32, (tm, 1), 0) + row0
    col_ids = lax.broadcasted_iota(jnp.int32, (1, B), 1)
    d2 = jnp.where(row_ids == col_ids, jnp.inf, d2)

    # Hardest-negative candidates kept as squared distances (sqrt deferred).
    rmin_ref[0] = jnp.min(d2, axis=1, keepdims=True)                     # (tm, 1)
    cmin_ref[0] = jnp.min(d2, axis=0, keepdims=True)                     # (1, B)


def _choose_block_rows(B, dtype, cap_bytes=4 * 1024 * 1024):
    """Largest tm dividing B, stepping by the dtype sublane packing, with the
    (tm, B) f32 cross-distance tile capped at cap_bytes."""
    step = max(8, 32 // jnp.dtype(dtype).itemsize)   # f32: 8, bf16: 16, int8/fp8: 32
    if B <= 512:
        return B                                     # full-dims blocks are always legal
    cap = (cap_bytes // (4 * B)) // step * step
    cap = max(step, min(B, cap))
    for tm in range(cap, step - 1, -step):
        if B % tm == 0:
            return tm
    return B


def _vmem_limit_bytes(B, D, tm, itemsize, resident_buffers):
    streamed = 2 * (2 * tm * D * itemsize)           # image + paired text, double-buffered
    resident = resident_buffers * (D * B * itemsize + 8 * max(B, 128) * 4)
    temps = 5 * tm * B * 4                           # xy / d2 / mask temporaries (f32)
    outs = 2 * (2 * tm * 128 * 4) + 2 * (8 * max(B, 128) * 4)
    est = streamed + resident + temps + outs + (4 << 20)
    return int(min(max(est, 32 << 20), 64 << 20))


def _build_partials_call(B, D, tm, dtype, *, single_buffer_resident):
    n_blocks = B // tm
    resident_kwargs = (
        {"pipeline_mode": pl.Buffered(1)} if single_buffer_resident else {})
    grid_spec = pltpu.PrefetchScalarGridSpec(
        num_scalar_prefetch=0,
        grid=(n_blocks,),
        in_specs=[
            pl.BlockSpec((tm, D), lambda i: (i, 0)),                    # image rows (streamed)
            pl.BlockSpec((tm, D), lambda i: (i, 0)),                    # paired text rows (streamed)
            pl.BlockSpec((D, B), lambda i: (0, 0), **resident_kwargs),  # text^T (resident)
            pl.BlockSpec((1, B), lambda i: (0, 0), **resident_kwargs),  # text squared norms
        ],
        out_specs=[
            pl.BlockSpec((1, tm, 1), lambda i: (i, 0, 0)),              # paired pos d^2
            pl.BlockSpec((1, tm, 1), lambda i: (i, 0, 0)),              # per-row off-diag min d^2
            pl.BlockSpec((1, 1, B), lambda i: (i, 0, 0)),               # per-col min d^2 partials
        ],
    )
    itemsize = jnp.dtype(dtype).itemsize
    return pl.pallas_call(
        _triplet_partials_kernel,
        out_shape=(
            jax.ShapeDtypeStruct((n_blocks, tm, 1), jnp.float32),
            jax.ShapeDtypeStruct((n_blocks, tm, 1), jnp.float32),
            jax.ShapeDtypeStruct((n_blocks, 1, B), jnp.float32),
        ),
        grid_spec=grid_spec,
        compiler_params=pltpu.CompilerParams(
            dimension_semantics=("parallel",),
            vmem_limit_bytes=_vmem_limit_bytes(
                B, D, tm, itemsize, 1 if single_buffer_resident else 2),
        ),
    )


def triplet_loss(image_embeddings, text_embeddings, margin=0.2, block_rows=None):
    """Scalar triplet loss matching the PyTorch TripletLoss.forward."""
    B, D = image_embeddings.shape
    assert text_embeddings.shape == (B, D)
    dtype = image_embeddings.dtype
    tm = int(block_rows) if block_rows is not None else _choose_block_rows(B, dtype)
    assert B % tm == 0, (B, tm)
    n_blocks = B // tm

    # Hoisted one-time preprocessing: transposed text for the canonical MXU
    # orientation and the text squared norms as a lane-major (1, B) row.
    txt_t = jnp.transpose(text_embeddings)                               # (D, B)
    yy = jnp.sum(text_embeddings.astype(jnp.float32) ** 2, axis=-1)[None, :]

    args = (image_embeddings, text_embeddings, txt_t, yy)
    try:
        pos_d2, rmin_d2, cmin_d2 = _build_partials_call(
            B, D, tm, dtype, single_buffer_resident=True)(*args)
    except Exception:
        # pl.Buffered(1) single-buffering not supported by this JAX/Mosaic
        # build -> fall back to default double-buffered resident operands.
        pos_d2, rmin_d2, cmin_d2 = _build_partials_call(
            B, D, tm, dtype, single_buffer_resident=False)(*args)

    # O(B * n_blocks) epilogue: combine the column-min partials, sqrt ~3B
    # values, hinge + mean.  The diagonal's "+margin" candidate is implied by
    # the algebraic identity noted in the header.
    pos = jnp.sqrt(jnp.maximum(pos_d2.reshape(B), 0.0))
    neg_img = jnp.sqrt(jnp.maximum(rmin_d2.reshape(B), 0.0))
    col_min = jnp.min(cmin_d2.reshape(n_blocks, B), axis=0)
    neg_txt = jnp.sqrt(jnp.maximum(col_min, 0.0))
    m = jnp.float32(margin)
    loss_img = jnp.mean(jnp.maximum(pos + m - neg_img, 0.0))
    loss_txt = jnp.mean(jnp.maximum(pos + m - neg_txt, 0.0))
    return loss_img + loss_txt


def _reference(image_embeddings, text_embeddings, margin=0.2):
    x = image_embeddings.astype(jnp.float32)
    y = text_embeddings.astype(jnp.float32)
    xy = jnp.dot(x, y.T, precision=lax.Precision.HIGHEST)
    d2 = jnp.sum(x * x, -1)[:, None] + jnp.sum(y * y, -1)[None, :] - 2.0 * xy
    dist = jnp.sqrt(jnp.maximum(d2, 0.0))
    eye = jnp.eye(dist.shape[0], dtype=jnp.float32)
    pos = jnp.diag(dist)
    neg_i = jnp.min(dist + eye * margin, axis=1)
    neg_t = jnp.min(dist + eye * margin, axis=0)
    return (jnp.mean(jax.nn.relu(pos - neg_i + margin))
            + jnp.mean(jax.nn.relu(pos - neg_t + margin)))


if __name__ == "__main__":
    key = jax.random.PRNGKey(0)
    k1, k2 = jax.random.split(key)
    B, D = 16, 32  # small batch of paired image/text embeddings
    image_embeddings = jax.random.normal(k1, (B, D), dtype=jnp.float32)
    text_embeddings = jax.random.normal(k2, (B, D), dtype=jnp.float32)

    ref = _reference(image_embeddings, text_embeddings)

    # Multi-block path: grid of 2 independent ("parallel") row blocks.
    loss_blocked = triplet_loss(image_embeddings, text_embeddings, block_rows=8)
    jax.block_until_ready(loss_blocked)
    assert jnp.allclose(loss_blocked, ref, atol=1e-4, rtol=1e-4), (loss_blocked, ref)

    # Auto-chosen single-block path (tm == B).
    loss_full = triplet_loss(image_embeddings, text_embeddings)
    jax.block_until_ready(loss_full)
    assert jnp.allclose(loss_full, ref, atol=1e-4, rtol=1e-4), (loss_full, ref)

    print("KERNEL_OK")
</pallas_src>

<mosaic_0001>
module attributes {stable_mosaic.version = 11 : i64} {
  func.func @_triplet_partials_kernel(%arg0: i32, %arg1: memref<8x32xf32, #tpu.memory_space<vmem>>, %arg2: memref<8x32xf32, #tpu.memory_space<vmem>>, %arg3: memref<32x16xf32, #tpu.memory_space<vmem>>, %arg4: memref<1x16xf32, #tpu.memory_space<vmem>>, %arg5: memref<1x8x1xf32, #tpu.memory_space<vmem>>, %arg6: memref<1x8x1xf32, #tpu.memory_space<vmem>>, %arg7: memref<1x1x16xf32, #tpu.memory_space<vmem>>) attributes {dimension_semantics = [#tpu.dimension_semantics<parallel>], iteration_bounds = array<i64: 2>, scalar_prefetch = 0 : i64, scratch_operands = 0 : i64, tpu.core_type = #tpu.core_type<tc>, window_params = [{transform_indices = @transform_0, window_bounds = array<i64: 8, 32>}, {transform_indices = @transform_1, window_bounds = array<i64: 8, 32>}, {pipeline_mode = #tpu.pipeline_mode<synchronous>, transform_indices = @transform_2, window_bounds = array<i64: 32, 16>}, {pipeline_mode = #tpu.pipeline_mode<synchronous>, transform_indices = @transform_3, window_bounds = array<i64: 1, 16>}, {transform_indices = @transform_4, window_bounds = array<i64: 1, 8, 1>}, {transform_indices = @transform_5, window_bounds = array<i64: 1, 8, 1>}, {transform_indices = @transform_6, window_bounds = array<i64: 1, 1, 16>}]} {
    %c8_i32 = arith.constant 8 : i32
    %0 = arith.muli %arg0, %c8_i32 : i32
    %c0 = arith.constant 0 : index
    %c0_0 = arith.constant 0 : index
    %1 = vector.load %arg1[%c0, %c0_0] : memref<8x32xf32, #tpu.memory_space<vmem>>, vector<8x32xf32>
    %c0_1 = arith.constant 0 : index
    %c0_2 = arith.constant 0 : index
    %2 = vector.load %arg2[%c0_1, %c0_2] : memref<8x32xf32, #tpu.memory_space<vmem>>, vector<8x32xf32>
    %3 = arith.subf %1, %2 : vector<8x32xf32>
    %4 = arith.mulf %3, %3 : vector<8x32xf32>
    %cst = arith.constant dense<0.000000e+00> : vector<8xf32>
    %5 = vector.multi_reduction <add>, %4, %cst [1] : vector<8x32xf32> to vector<8xf32>
    %6 = vector.shape_cast %5 : vector<8xf32> to vector<8x1xf32>
    %c0_3 = arith.constant 0 : index
    %c0_4 = arith.constant 0 : index
    %c0_5 = arith.constant 0 : index
    %7 = vector.load %arg5[%c0_3, %c0_4, %c0_5] : memref<1x8x1xf32, #tpu.memory_space<vmem>>, vector<1x8x1xf32>
    %8 = vector.shape_cast %7 : vector<1x8x1xf32> to vector<8x1xf32>
    %9 = vector.shape_cast %6 : vector<8x1xf32> to vector<1x8x1xf32>
    tpu.vector_store %arg5[%c0_3, %c0_4, %c0_5], %9 {strides = array<i32>} : memref<1x8x1xf32, #tpu.memory_space<vmem>>, vector<1x8x1xf32>,
    %10 = arith.mulf %1, %1 : vector<8x32xf32>
    %cst_6 = arith.constant dense<0.000000e+00> : vector<8xf32>
    %11 = vector.multi_reduction <add>, %10, %cst_6 [1] : vector<8x32xf32> to vector<8xf32>
    %12 = vector.shape_cast %11 : vector<8xf32> to vector<8x1xf32>
    %c0_7 = arith.constant 0 : index
    %c0_8 = arith.constant 0 : index
    %13 = vector.load %arg3[%c0_7, %c0_8] : memref<32x16xf32, #tpu.memory_space<vmem>>, vector<32x16xf32>
    %cst_9 = arith.constant dense<0.000000e+00> : vector<8x16xf32>
    %14 = tpu.matmul %1, %13, %cst_9 {dimension_numbers = #tpu.dot_dimension_numbers<[1], [0], [0], [1], [0, 0, 1, 1], [], []>} : vector<8x32xf32>, vector<32x16xf32>, vector<8x16xf32> -> vector<8x16xf32>
    %c0_10 = arith.constant 0 : index
    %c0_11 = arith.constant 0 : index
    %15 = vector.load %arg4[%c0_10, %c0_11] : memref<1x16xf32, #tpu.memory_space<vmem>>, vector<1x16xf32>
    %16 = vector.broadcast %12 : vector<8x1xf32> to vector<8x16xf32>
    %17 = vector.broadcast %15 : vector<1x16xf32> to vector<8x16xf32>
    %18 = arith.addf %16, %17 : vector<8x16xf32>
    %cst_12 = arith.constant 2.000000e+00 : f32
    %19 = vector.broadcast %cst_12 : f32 to vector<8x16xf32>
    %20 = arith.mulf %19, %14 : vector<8x16xf32>
    %21 = arith.subf %18, %20 : vector<8x16xf32>
    %22 = tpu.iota {dimensions = array<i32: 0>} : vector<8x1xi32>
    %23 = vector.broadcast %0 : i32 to vector<8x1xi32>
    %24 = arith.addi %22, %23 : vector<8x1xi32>
    %25 = tpu.iota {dimensions = array<i32: 1>} : vector<1x16xi32>
    %26 = vector.broadcast %24 : vector<8x1xi32> to vector<8x16xi32>
    %27 = vector.broadcast %25 : vector<1x16xi32> to vector<8x16xi32>
    %28 = arith.cmpi eq, %26, %27 : vector<8x16xi32>
    %cst_13 = arith.constant 0x7F800000 : f32
    %29 = vector.broadcast %cst_13 : f32 to vector<8x16xf32>
    %30 = arith.select %28, %29, %21 : vector<8x16xi1>, vector<8x16xf32>
    %cst_14 = arith.constant dense<0x7F800000> : vector<8xf32>
    %31 = vector.multi_reduction <minimumf>, %30, %cst_14 [1] : vector<8x16xf32> to vector<8xf32>
    %32 = vector.shape_cast %31 : vector<8xf32> to vector<8x1xf32>
    %c0_15 = arith.constant 0 : index
    %c0_16 = arith.constant 0 : index
    %c0_17 = arith.constant 0 : index
    %33 = vector.load %arg6[%c0_15, %c0_16, %c0_17] : memref<1x8x1xf32, #tpu.memory_space<vmem>>, vector<1x8x1xf32>
    %34 = vector.shape_cast %33 : vector<1x8x1xf32> to vector<8x1xf32>
    %35 = vector.shape_cast %32 : vector<8x1xf32> to vector<1x8x1xf32>
    tpu.vector_store %arg6[%c0_15, %c0_16, %c0_17], %35 {strides = array<i32>} : memref<1x8x1xf32, #tpu.memory_space<vmem>>, vector<1x8x1xf32>,
    %cst_18 = arith.constant dense<0x7F800000> : vector<16xf32>
    %36 = vector.multi_reduction <minimumf>, %30, %cst_18 [0] : vector<8x16xf32> to vector<16xf32>
    %37 = vector.shape_cast %36 : vector<16xf32> to vector<1x16xf32>
    %c0_19 = arith.constant 0 : index
    %c0_20 = arith.constant 0 : index
    %c0_21 = arith.constant 0 : index
    %38 = vector.load %arg7[%c0_19, %c0_20, %c0_21] : memref<1x1x16xf32, #tpu.memory_space<vmem>>, vector<1x1x16xf32>
    %39 = vector.shape_cast %38 : vector<1x1x16xf32> to vector<1x16xf32>
    %40 = vector.shape_cast %37 : vector<1x16xf32> to vector<1x1x16xf32>
    tpu.vector_store %arg7[%c0_19, %c0_20, %c0_21], %40 {strides = array<i32>} : memref<1x1x16xf32, #tpu.memory_space<vmem>>, vector<1x1x16xf32>,
    return
  }
  func.func @transform_0(%arg0: i32) -> (i32, i32) {
    %c0_i32 = arith.constant 0 : i32
    %c0_i32_0 = arith.constant 0 : i32
    return %arg0, %c0_i32 : i32, i32
  }
  func.func @transform_1(%arg0: i32) -> (i32, i32) {
    %c0_i32 = arith.constant 0 : i32
    %c0_i32_0 = arith.constant 0 : i32
    return %arg0, %c0_i32 : i32, i32
  }
  func.func @transform_2(%arg0: i32) -> (i32, i32) {
    %c0_i32 = arith.constant 0 : i32
    %c0_i32_0 = arith.constant 0 : i32
    %c0_i32_1 = arith.constant 0 : i32
    return %c0_i32, %c0_i32_0 : i32, i32
  }
  func.func @transform_3(%arg0: i32) -> (i32, i32) {
    %c0_i32 = arith.constant 0 : i32
    %c0_i32_0 = arith.constant 0 : i32
    %c0_i32_1 = arith.constant 0 : i32
    return %c0_i32, %c0_i32_0 : i32, i32
  }
  func.func @transform_4(%arg0: i32) -> (i32, i32, i32) {
    %c0_i32 = arith.constant 0 : i32
    %c0_i32_0 = arith.constant 0 : i32
    %c0_i32_1 = arith.constant 0 : i32
    return %arg0, %c0_i32, %c0_i32_0 : i32, i32, i32
  }
  func.func @transform_5(%arg0: i32) -> (i32, i32, i32) {
    %c0_i32 = arith.constant 0 : i32
    %c0_i32_0 = arith.constant 0 : i32
    %c0_i32_1 = arith.constant 0 : i32
    return %arg0, %c0_i32, %c0_i32_0 : i32, i32, i32
  }
  func.func @transform_6(%arg0: i32) -> (i32, i32, i32) {
    %c0_i32 = arith.constant 0 : i32
    %c0_i32_0 = arith.constant 0 : i32
    %c0_i32_1 = arith.constant 0 : i32
    return %arg0, %c0_i32, %c0_i32_0 : i32, i32, i32
  }
}

module attributes {stable_mosaic.version = 11 : i64} {
  func.func @_triplet_partials_kernel(%arg0: i32, %arg1: memref<8x32xf32, #tpu.memory_space<vmem>>, %arg2: memref<8x32xf32, #tpu.memory_space<vmem>>, %arg3: memref<32x16xf32, #tpu.memory_space<vmem>>, %arg4: memref<1x16xf32, #tpu.memory_space<vmem>>, %arg5: memref<1x8x1xf32, #tpu.memory_space<vmem>>, %arg6: memref<1x8x1xf32, #tpu.memory_space<vmem>>, %arg7: memref<1x1x16xf32, #tpu.memory_space<vmem>>) attributes {dimension_semantics = [#tpu.dimension_semantics<parallel>], iteration_bounds = array<i64: 2>, scalar_prefetch = 0 : i64, scratch_operands = 0 : i64, tpu.core_type = #tpu.core_type<tc>, window_params = [{transform_indices = @transform_0, window_bounds = array<i64: 8, 32>}, {transform_indices = @transform_1, window_bounds = array<i64: 8, 32>}, {pipeline_mode = #tpu.pipeline_mode<synchronous>, transform_indices = @transform_2, window_bounds = array<i64: 32, 16>}, {pipeline_mode = #tpu.pipeline_mode<synchronous>, transform_indices = @transform_3, window_bounds = array<i64: 1, 16>}, {transform_indices = @transform_4, window_bounds = array<i64: 1, 8, 1>}, {transform_indices = @transform_5, window_bounds = array<i64: 1, 8, 1>}, {transform_indices = @transform_6, window_bounds = array<i64: 1, 1, 16>}]} {
    %c8_i32 = arith.constant 8 : i32
    %0 = arith.muli %arg0, %c8_i32 : i32
    %c0 = arith.constant 0 : index
    %c0_0 = arith.constant 0 : index
    %1 = vector.load %arg1[%c0, %c0_0] : memref<8x32xf32, #tpu.memory_space<vmem>>, vector<8x32xf32>
    %c0_1 = arith.constant 0 : index
    %c0_2 = arith.constant 0 : index
    %2 = vector.load %arg2[%c0_1, %c0_2] : memref<8x32xf32, #tpu.memory_space<vmem>>, vector<8x32xf32>
    %3 = arith.subf %1, %2 : vector<8x32xf32>
    %4 = arith.mulf %3, %3 : vector<8x32xf32>
    %cst = arith.constant dense<0.000000e+00> : vector<8xf32>
    %5 = vector.multi_reduction <add>, %4, %cst [1] : vector<8x32xf32> to vector<8xf32>
    %6 = vector.shape_cast %5 : vector<8xf32> to vector<8x1xf32>
    %c0_3 = arith.constant 0 : index
    %c0_4 = arith.constant 0 : index
    %c0_5 = arith.constant 0 : index
    %7 = vector.load %arg5[%c0_3, %c0_4, %c0_5] : memref<1x8x1xf32, #tpu.memory_space<vmem>>, vector<1x8x1xf32>
    %8 = vector.shape_cast %7 : vector<1x8x1xf32> to vector<8x1xf32>
    %9 = vector.shape_cast %6 : vector<8x1xf32> to vector<1x8x1xf32>
    tpu.vector_store %arg5[%c0_3, %c0_4, %c0_5], %9 {strides = array<i32>} : memref<1x8x1xf32, #tpu.memory_space<vmem>>, vector<1x8x1xf32>,
    %10 = arith.mulf %1, %1 : vector<8x32xf32>
    %cst_6 = arith.constant dense<0.000000e+00> : vector<8xf32>
    %11 = vector.multi_reduction <add>, %10, %cst_6 [1] : vector<8x32xf32> to vector<8xf32>
    %12 = vector.shape_cast %11 : vector<8xf32> to vector<8x1xf32>
    %c0_7 = arith.constant 0 : index
    %c0_8 = arith.constant 0 : index
    %13 = vector.load %arg3[%c0_7, %c0_8] : memref<32x16xf32, #tpu.memory_space<vmem>>, vector<32x16xf32>
    %cst_9 = arith.constant dense<0.000000e+00> : vector<8x16xf32>
    %14 = tpu.matmul %1, %13, %cst_9 {dimension_numbers = #tpu.dot_dimension_numbers<[1], [0], [0], [1], [0, 0, 1, 1], [], []>} : vector<8x32xf32>, vector<32x16xf32>, vector<8x16xf32> -> vector<8x16xf32>
    %c0_10 = arith.constant 0 : index
    %c0_11 = arith.constant 0 : index
    %15 = vector.load %arg4[%c0_10, %c0_11] : memref<1x16xf32, #tpu.memory_space<vmem>>, vector<1x16xf32>
    %16 = vector.broadcast %12 : vector<8x1xf32> to vector<8x16xf32>
    %17 = vector.broadcast %15 : vector<1x16xf32> to vector<8x16xf32>
    %18 = arith.addf %16, %17 : vector<8x16xf32>
    %cst_12 = arith.constant 2.000000e+00 : f32
    %19 = vector.broadcast %cst_12 : f32 to vector<8x16xf32>
    %20 = arith.mulf %19, %14 : vector<8x16xf32>
    %21 = arith.subf %18, %20 : vector<8x16xf32>
    %22 = tpu.iota {dimensions = array<i32: 0>} : vector<8x1xi32>
    %23 = vector.broadcast %0 : i32 to vector<8x1xi32>
    %24 = arith.addi %22, %23 : vector<8x1xi32>
    %25 = tpu.iota {dimensions = array<i32: 1>} : vector<1x16xi32>
    %26 = vector.broadcast %24 : vector<8x1xi32> to vector<8x16xi32>
    %27 = vector.broadcast %25 : vector<1x16xi32> to vector<8x16xi32>
    %28 = arith.cmpi eq, %26, %27 : vector<8x16xi32>
    %cst_13 = arith.constant 0x7F800000 : f32
    %29 = vector.broadcast %cst_13 : f32 to vector<8x16xf32>
    %30 = arith.select %28, %29, %21 : vector<8x16xi1>, vector<8x16xf32>
    %cst_14 = arith.constant dense<0x7F800000> : vector<8xf32>
    %31 = vector.multi_reduction <minimumf>, %30, %cst_14 [1] : vector<8x16xf32> to vector<8xf32>
    %32 = vector.shape_cast %31 : vector<8xf32> to vector<8x1xf32>
    %c0_15 = arith.constant 0 : index
    %c0_16 = arith.constant 0 : index
    %c0_17 = arith.constant 0 : index
    %33 = vector.load %arg6[%c0_15, %c0_16, %c0_17] : memref<1x8x1xf32, #tpu.memory_space<vmem>>, vector<1x8x1xf32>
    %34 = vector.shape_cast %33 : vector<1x8x1xf32> to vector<8x1xf32>
    %35 = vector.shape_cast %32 : vector<8x1xf32> to vector<1x8x1xf32>
    tpu.vector_store %arg6[%c0_15, %c0_16, %c0_17], %35 {strides = array<i32>} : memref<1x8x1xf32, #tpu.memory_space<vmem>>, vector<1x8x1xf32>,
    %cst_18 = arith.constant dense<0x7F800000> : vector<16xf32>
    %36 = vector.multi_reduction <minimumf>, %30, %cst_18 [0] : vector<8x16xf32> to vector<16xf32>
    %37 = vector.shape_cast %36 : vector<16xf32> to vector<1x16xf32>
    %c0_19 = arith.constant 0 : index
    %c0_20 = arith.constant 0 : index
    %c0_21 = arith.constant 0 : index
    %38 = vector.load %arg7[%c0_19, %c0_20, %c0_21] : memref<1x1x16xf32, #tpu.memory_space<vmem>>, vector<1x1x16xf32>
    %39 = vector.shape_cast %38 : vector<1x1x16xf32> to vector<1x16xf32>
    %40 = vector.shape_cast %37 : vector<1x16xf32> to vector<1x1x16xf32>
    tpu.vector_store %arg7[%c0_19, %c0_20, %c0_21], %40 {strides = array<i32>} : memref<1x1x16xf32, #tpu.memory_space<vmem>>, vector<1x1x16xf32>,
    return
  }
  func.func @transform_0(%arg0: i32) -> (i32, i32) {
    %c0_i32 = arith.constant 0 : i32
    %c0_i32_0 = arith.constant 0 : i32
    return %arg0, %c0_i32 : i32, i32
  }
  func.func @transform_1(%arg0: i32) -> (i32, i32) {
    %c0_i32 = arith.constant 0 : i32
    %c0_i32_0 = arith.constant 0 : i32
    return %arg0, %c0_i32 : i32, i32
  }
  func.func @transform_2(%arg0: i32) -> (i32, i32) {
    %c0_i32 = arith.constant 0 : i32
    %c0_i32_0 = arith.constant 0 : i32
    %c0_i32_1 = arith.constant 0 : i32
    return %c0_i32, %c0_i32_0 : i32, i32
  }
  func.func @transform_3(%arg0: i32) -> (i32, i32) {
    %c0_i32 = arith.constant 0 : i32
    %c0_i32_0 = arith.constant 0 : i32
    %c0_i32_1 = arith.constant 0 : i32
    return %c0_i32, %c0_i32_0 : i32, i32
  }
  func.func @transform_4(%arg0: i32) -> (i32, i32, i32) {
    %c0_i32 = arith.constant 0 : i32
    %c0_i32_0 = arith.constant 0 : i32
    %c0_i32_1 = arith.constant 0 : i32
    return %arg0, %c0_i32, %c0_i32_0 : i32, i32, i32
  }
  func.func @transform_5(%arg0: i32) -> (i32, i32, i32) {
    %c0_i32 = arith.constant 0 : i32
    %c0_i32_0 = arith.constant 0 : i32
    %c0_i32_1 = arith.constant 0 : i32
    return %arg0, %c0_i32, %c0_i32_0 : i32, i32, i32
  }
  func.func @transform_6(%arg0: i32) -> (i32, i32, i32) {
    %c0_i32 = arith.constant 0 : i32
    %c0_i32_0 = arith.constant 0 : i32
    %c0_i32_1 = arith.constant 0 : i32
    return %arg0, %c0_i32, %c0_i32_0 : i32, i32, i32
  }
}

</mosaic_0001>

<llo_original>
// kernel: tpu_custom_call.1
$region0: #{tpu_custom_call.1}
  #allocation0 [shape = 'u32[]', space=smem, size = 0x4, offset = 0x4, fixed_abs, tag = 'smem constant byte address 0x4 - core index']
  #allocation1 [shape = 'u32[144,128]{1,0:T(1,128)}', space=vmem, size = 0x12000, scoped, tag = 'internal scratch']
  %s0 = inlined_call_operand.vmem [shape: f32[16,32], index: 0, kind: input, shape index: {}]
  %s1 = inlined_call_operand.vmem [shape: f32[16,32], index: 1, kind: input, shape index: {}]
  %s2 = inlined_call_operand.vmem [shape: f32[32,16], index: 2, kind: input, shape index: {}]
  %s3 = inlined_call_operand.vmem [shape: f32[1,16], index: 3, kind: input, shape index: {}]
  %s4 = inlined_call_operand.vmem [shape: f32[2,8,1], index: 4, kind: output, shape index: {0}]
  %s5 = inlined_call_operand.vmem [shape: f32[2,8,1], index: 5, kind: output, shape index: {1}]
  %s6 = inlined_call_operand.hbm [shape: f32[2,1,16], index: 6, kind: output, shape index: {2}]
  %7 = xla_tuple %s4, %s5, %s6
  %s8 = sld [smem:[#allocation0]]
  $region65: #{tpu_custom_call.1} parent=0
    _
  %s10 = ssub.s32 1, %s8
  %s11 = scalar_select 0, %s10, %s8
  $region1: #{tpu_custom_call.1} parent=0
    #allocation2 [shape = 'u8[1024]{0}', space=vmem, size = 0x400, scoped, tag = 'output window, operand 2']
    #allocation3 [shape = 's32[2]{0}', space=sflag, size = 0x8, scoped, tag = 'scoped memory for tpu_custom_call.1']
    %12 = vsyncpa [#allocation3], 0
    %s13 = scalar_lea.sflag [#allocation3], 1
    %14 = vsyncpa %s13, 0
    loop: start=0, step=1, limit=4
    $region2: #{tpu_custom_call.1} parent=1 // loop_pre_header
      _
    $region3: #{tpu_custom_call.1} parent=1 // loop_header
      %s16 = sphi 0, %s20
      %p17 = scmp.ge.s32.totalorder %s16, 4
      %s26 = sphi 0, %s28
      %s29 = sphi 0, %s26
      %s30 = sphi 0, %s29
      %s46 = sphi 0, %s30
      %s52 = sphi 0, %s54
      %s55 = sphi 0, %s52
      %s56 = sphi 0, %s55
      %s72 = sphi 0, %s56
      %s76 = sphi 0, %s76
      %s78 = sphi 0, %s76
      %s79 = sphi 0, %s78
      %s93 = sphi 0, %s79
      %s97 = sphi 0, %s97
      %s99 = sphi 0, %s97
      %s100 = sphi 0, %s99
      %s114 = sphi 0, %s100
      %s120 = sphi 0, %s122
      %s123 = sphi 0, %s120
      %s124 = sphi 0, %s123
      %s140 = sphi 0, %s124
      %s146 = sphi 0, %s148
      %s149 = sphi 0, %s146
      %s150 = sphi 0, %s149
      %s166 = sphi 0, %s150
      %s172 = sphi 0, %s174
      %s175 = sphi 0, %s172
      %s176 = sphi 0, %s175
      %s192 = sphi 0, %s176
    $region4: #{tpu_custom_call.1} parent=1 // loop_header_branch
      %19 = sbr.rel (%p17) target = $region8
    $region5: #{tpu_custom_call.1} parent=1 // loop_body
      %s21 = ssub.s32 %s16, 1
      %s22 = ssub.s32 %s16, 2
      %s23 = sadd.s32 %s16, 1
      %s24 = ssub.s32 %s16, %s23
      %p25 = scmp.eq.s32.totalorder %s24, 0
      %s27 = sadd.s32 %s26, 1
      %s28 = scalar_select %p25, %s26, %s27
      %p31 = pneg %p25
      %p32 = scmp.eq.s32.totalorder %s16, 1
      %p33 = por %p31, %p32
      %p34 = scmp.ne.s32.totalorder %s26, %s29
      %p35 = scmp.eq.s32.totalorder %s16, 0
      %p36 = por %p34, %p35
      %p37 = scmp.ne.s32.totalorder %s26, %s29
      %p38 = scmp.eq.s32.totalorder %s21, 1
      %p39 = por %p37, %p38
      %p40 = scmp.ne.s32.totalorder %s29, %s30
      %p41 = scmp.eq.s32.totalorder %s21, 0
      %p42 = por %p40, %p41
      %p43 = scmp.ne.s32.totalorder %s29, %s30
      %p44 = scmp.eq.s32.totalorder %s22, 1
      %p45 = por %p43, %p44
      %p47 = scmp.ne.s32.totalorder %s30, %s46
      %p48 = scmp.eq.s32.totalorder %s22, 0
      %p49 = por %p47, %p48
      %s50 = ssub.s32 %s16, %s23
      %p51 = scmp.eq.s32.totalorder %s50, 0
      %s53 = sadd.s32 %s52, 1
      %s54 = scalar_select %p51, %s52, %s53
      %p57 = pneg %p51
      %p58 = scmp.eq.s32.totalorder %s16, 1
      %p59 = por %p57, %p58
      %p60 = scmp.ne.s32.totalorder %s52, %s55
      %p61 = scmp.eq.s32.totalorder %s16, 0
      %p62 = por %p60, %p61
      %p63 = scmp.ne.s32.totalorder %s52, %s55
      %p64 = scmp.eq.s32.totalorder %s21, 1
      %p65 = por %p63, %p64
      %p66 = scmp.ne.s32.totalorder %s55, %s56
      %p67 = scmp.eq.s32.totalorder %s21, 0
      %p68 = por %p66, %p67
      %p69 = scmp.ne.s32.totalorder %s55, %s56
      %p70 = scmp.eq.s32.totalorder %s22, 1
      %p71 = por %p69, %p70
      %p73 = scmp.ne.s32.totalorder %s56, %s72
      %p74 = scmp.eq.s32.totalorder %s22, 0
      %p75 = por %p73, %p74
      %s77 = sadd.s32 %s76, 1
      %p80 = scmp.eq.s32.totalorder %s16, 1
      %p81 = scmp.ne.s32.totalorder %s76, %s78
      %p82 = scmp.eq.s32.totalorder %s16, 0
      %p83 = por %p81, %p82
      %p84 = scmp.ne.s32.totalorder %s76, %s78
      %p85 = scmp.eq.s32.totalorder %s21, 1
      %p86 = por %p84, %p85
      %p87 = scmp.ne.s32.totalorder %s78, %s79
      %p88 = scmp.eq.s32.totalorder %s21, 0
      %p89 = por %p87, %p88
      %p90 = scmp.ne.s32.totalorder %s78, %s79
      %p91 = scmp.eq.s32.totalorder %s22, 1
      %p92 = por %p90, %p91
      %p94 = scmp.ne.s32.totalorder %s79, %s93
      %p95 = scmp.eq.s32.totalorder %s22, 0
      %p96 = por %p94, %p95
      %s98 = sadd.s32 %s97, 1
      %p101 = scmp.eq.s32.totalorder %s16, 1
      %p102 = scmp.ne.s32.totalorder %s97, %s99
      %p103 = scmp.eq.s32.totalorder %s16, 0
      %p104 = por %p102, %p103
      %p105 = scmp.ne.s32.totalorder %s97, %s99
      %p106 = scmp.eq.s32.totalorder %s21, 1
      %p107 = por %p105, %p106
      %p108 = scmp.ne.s32.totalorder %s99, %s100
      %p109 = scmp.eq.s32.totalorder %s21, 0
      %p110 = por %p108, %p109
      %p111 = scmp.ne.s32.totalorder %s99, %s100
      %p112 = scmp.eq.s32.totalorder %s22, 1
      %p113 = por %p111, %p112
      %p115 = scmp.ne.s32.totalorder %s100, %s114
      %p116 = scmp.eq.s32.totalorder %s22, 0
      %p117 = por %p115, %p116
      %s118 = ssub.s32 %s16, %s23
      %p119 = scmp.eq.s32.totalorder %s118, 0
      %s121 = sadd.s32 %s120, 1
      %s122 = scalar_select %p119, %s120, %s121
      %p125 = pneg %p119
      %p126 = scmp.eq.s32.totalorder %s16, 1
      %p127 = por %p125, %p126
      %p128 = scmp.ne.s32.totalorder %s120, %s123
      %p129 = scmp.eq.s32.totalorder %s16, 0
      %p130 = por %p128, %p129
      %p131 = scmp.ne.s32.totalorder %s120, %s123
      %p132 = scmp.eq.s32.totalorder %s21, 1
      %p133 = por %p131, %p132
      %p134 = scmp.ne.s32.totalorder %s123, %s124
      %p135 = scmp.eq.s32.totalorder %s21, 0
      %p136 = por %p134, %p135
      %p137 = scmp.ne.s32.totalorder %s123, %s124
      %p138 = scmp.eq.s32.totalorder %s22, 1
      %p139 = por %p137, %p138
      %p141 = scmp.ne.s32.totalorder %s124, %s140
      %p142 = scmp.eq.s32.totalorder %s22, 0
      %p143 = por %p141, %p142
      %s144 = ssub.s32 %s16, %s23
      %p145 = scmp.eq.s32.totalorder %s144, 0
      %s147 = sadd.s32 %s146, 1
      %s148 = scalar_select %p145, %s146, %s147
      %p151 = pneg %p145
      %p152 = scmp.eq.s32.totalorder %s16, 1
      %p153 = por %p151, %p152
      %p154 = scmp.ne.s32.totalorder %s146, %s149
      %p155 = scmp.eq.s32.totalorder %s16, 0
      %p156 = por %p154, %p155
      %p157 = scmp.ne.s32.totalorder %s146, %s149
      %p158 = scmp.eq.s32.totalorder %s21, 1
      %p159 = por %p157, %p158
      %p160 = scmp.ne.s32.totalorder %s149, %s150
      %p161 = scmp.eq.s32.totalorder %s21, 0
      %p162 = por %p160, %p161
      %p163 = scmp.ne.s32.totalorder %s149, %s150
      %p164 = scmp.eq.s32.totalorder %s22, 1
      %p165 = por %p163, %p164
      %p167 = scmp.ne.s32.totalorder %s150, %s166
      %p168 = scmp.eq.s32.totalorder %s22, 0
      %p169 = por %p167, %p168
      %s170 = ssub.s32 %s16, %s23
      %p171 = scmp.eq.s32.totalorder %s170, 0
      %s173 = sadd.s32 %s172, 1
      %s174 = scalar_select %p171, %s172, %s173
      %p177 = pneg %p171
      %p178 = scmp.eq.s32.totalorder %s16, 1
      %p179 = por %p177, %p178
      %p180 = scmp.ne.s32.totalorder %s172, %s175
      %p181 = scmp.eq.s32.totalorder %s16, 0
      %p182 = por %p180, %p181
      %p183 = scmp.ne.s32.totalorder %s172, %s175
      %p184 = scmp.eq.s32.totalorder %s21, 1
      %p185 = por %p183, %p184
      %p186 = scmp.ne.s32.totalorder %s175, %s176
      %p187 = scmp.eq.s32.totalorder %s21, 0
      %p188 = por %p186, %p187
      %p189 = scmp.ne.s32.totalorder %s175, %s176
      %p190 = scmp.eq.s32.totalorder %s22, 1
      %p191 = por %p189, %p190
      %p193 = scmp.ne.s32.totalorder %s176, %s192
      %p194 = scmp.eq.s32.totalorder %s22, 0
      %p195 = por %p193, %p194
      %p196 = scmp.le.s32.totalorder 1, %s16
      %p197 = scmp.lt.s32.totalorder %s16, 3
      %p198 = pnand %p196, %p197
      %p199 = pneg %p198
      // Predicated region
      $region9: #{tpu_custom_call.1} parent=5 // pred_check
        _
      $region10: #{tpu_custom_call.1} parent=5 // pred_check_branch
        %201 = sbr.rel (%p198) target = $region12
      $region11: #{tpu_custom_call.1} parent=5 // pred_region
        %s202 = ssub.s32 %s16, 1
        // Predicated region
        $region13: #{tpu_custom_call.1} parent=11 // pred_check
          %p203 = pneg %p89
        $region14: #{tpu_custom_call.1} parent=11 // pred_check_branch
          %205 = sbr.rel (%p203) target = $region16
        $region15: #{tpu_custom_call.1} parent=11 // pred_region
          _
        $region16: #{tpu_custom_call.1} parent=11 // pred_fallthru
          _
        // Predicated region
        $region17: #{tpu_custom_call.1} parent=11 // pred_check
          %p206 = pneg %p110
        $region18: #{tpu_custom_call.1} parent=11 // pred_check_branch
          %208 = sbr.rel (%p206) target = $region20
        $region19: #{tpu_custom_call.1} parent=11 // pred_region
          _
        $region20: #{tpu_custom_call.1} parent=11 // pred_fallthru
          _
      $region12: #{tpu_custom_call.1} parent=5 // pred_fallthru
        _
      %p209 = scmp.lt.s32.totalorder %s16, 2
      // Predicated region
      $region21: #{tpu_custom_call.1} parent=5 // pred_check
        %p210 = pneg %p209
      $region22: #{tpu_custom_call.1} parent=5 // pred_check_branch
        %212 = sbr.rel (%p210) target = $region24
      $region23: #{tpu_custom_call.1} parent=5 // pred_region
        // Predicated region
        $region25: #{tpu_custom_call.1} parent=23 // pred_check
          %p213 = pneg %p36
        $region26: #{tpu_custom_call.1} parent=23 // pred_check_branch
          %215 = sbr.rel (%p213) target = $region28
        $region27: #{tpu_custom_call.1} parent=23 // pred_region
          %p216 = scmp.lt.s32.totalorder %s16, 1
          %s217 = scalar_select %p216, %s16, 1
          %s218 = smul.addr %s217, 8
          %s219 = scalar_lea.vmem %s0, %s218
        $region28: #{tpu_custom_call.1} parent=23 // pred_fallthru
          _
        // Predicated region
        $region29: #{tpu_custom_call.1} parent=23 // pred_check
          %p220 = pneg %p62
        $region30: #{tpu_custom_call.1} parent=23 // pred_check_branch
          %222 = sbr.rel (%p220) target = $region32
        $region31: #{tpu_custom_call.1} parent=23 // pred_region
          %p223 = scmp.lt.s32.totalorder %s16, 1
          %s224 = scalar_select %p223, %s16, 1
          %s225 = smul.addr %s224, 8
          %s226 = scalar_lea.vmem %s1, %s225
        $region32: #{tpu_custom_call.1} parent=23 // pred_fallthru
          _
      $region24: #{tpu_custom_call.1} parent=5 // pred_fallthru
        _
      %p227 = scmp.le.s32.totalorder 1, %s16
      %p228 = scmp.lt.s32.totalorder %s16, 3
      %p229 = pnand %p227, %p228
      %p230 = pneg %p229
      // Predicated region
      $region33: #{tpu_custom_call.1} parent=5 // pred_check
        _
      $region34: #{tpu_custom_call.1} parent=5 // pred_check_branch
        %232 = sbr.rel (%p229) target = $region36
      $region35: #{tpu_custom_call.1} parent=5 // pred_region
        %s233 = ssub.s32 %s16, 1
        %p234 = scmp.lt.s32.totalorder %s21, 1
        %s235 = scalar_select %p234, %s21, 1
        %s236 = smul.addr %s235, 8
        %s237 = scalar_lea.vmem %s0, %s236
        %p238 = pneg %p42
        %p239 = pneg %p39
        %p240 = scmp.lt.s32.totalorder %s21, 1
        %s241 = scalar_select %p240, %s21, 1
        %s242 = smul.addr %s241, 8
        %s243 = scalar_lea.vmem %s1, %s242
        %p244 = pneg %p68
        %p245 = pneg %p65
        %p246 = pneg %p89
        %p247 = pneg %p86
        %p248 = pneg %p110
        %p249 = pneg %p107
        %p250 = pneg %p136
        %p251 = pneg %p133
        %p252 = scmp.lt.s32.totalorder %s21, 1
        %s253 = scalar_select %p252, %s21, 1
        %s254 = smul.addr %s253, 8
        %s255 = scalar_lea.vmem %s4, %s254
        %p256 = pneg %p162
        %p257 = pneg %p159
        %p258 = scmp.lt.s32.totalorder %s21, 1
        %s259 = scalar_select %p258, %s21, 1
        %s260 = smul.addr %s259, 8
        %s261 = scalar_lea.vmem %s5, %s260
        %p262 = pneg %p188
        %p263 = pneg %p185
        %s264 = sand.u32 %s175, 1
        %s265 = scalar_lea.sflag [#allocation3], %s264
        %s266 = sand.u32 %s175, 1
        %s267 = scalar_lea.vmem [#allocation2], %s266
        %p268 = scmp.lt.s32.totalorder %s21, 1
        %s269 = scalar_select %p268, %s21, 1
        %s270 = smul.addr %s269, 8
        %s271 = scalar_lea.vmem %s0, %s270
        %p272 = scmp.lt.s32.totalorder %s21, 1
        %s273 = scalar_select %p272, %s21, 1
        %s274 = smul.addr %s273, 8
        %s275 = scalar_lea.vmem %s1, %s274
        %p276 = scmp.lt.s32.totalorder %s21, 1
        %s277 = scalar_select %p276, %s21, 1
        %s278 = smul.addr %s277, 8
        %s279 = scalar_lea.vmem %s4, %s278
        %p280 = scmp.lt.s32.totalorder %s21, 1
        %s281 = scalar_select %p280, %s21, 1
        %s282 = smul.addr %s281, 8
        %s283 = scalar_lea.vmem %s5, %s282
        %s284 = smul.u32 %s21, 8
        %v285 = vld [vmem:[%s271] sm:$0xff]
        %v286 = vld [vmem:[%s275] sm:$0xff]
        %v287 = vsub.f32 %v285, %v286
        %v288 = vmul.f32 %v287, %v287
        %vm289 = vcmask 261120
        %v290 = vsel %vm289, %v288, 0.0
        %291 = vadd.xlane.f32.xlu0 %v290
        %v292 = vpop.xlane.xlu0 %291
        %vm293 = vcmask 7168
        %294 = vst.msk [vmem:[%s279] sm:$0xff] %vm293, %v292
        %v295 = vmul.f32 %v285, %v285
        %v296 = vsel %vm289, %v295, 0.0
        %297 = vadd.xlane.f32.xlu0 %v296
        %v298 = vpop.xlane.xlu0 %297
        %v299 = vld [vmem:[%s2] sm:$0xff]
        %v300 = vld [vmem:[%s2 + $0x8] sm:$0xff]
        %v301 = vld [vmem:[%s2 + $0x10] sm:$0xff]
        %v302 = vld [vmem:[%s2 + $0x18] sm:$0xff]
        %v304 = vsel %vm289, %v285, 0
        %306 = vmatprep.subr.mxu0 0.0
        %307 = vmatpush1.msra.mxu0 %v299
        %308 = vmatprep.subr.mxu0 0.0
        %309 = vmatpush1.msra.mxu0 %v300
        %310 = vmatprep.subr.mxu0 0.0
        %311 = vmatpush1.msra.mxu0 %v301
        %312 = vmatprep.subr.mxu0 0.0
        %313 = vmatpush1.msra.mxu0 %v302
        %314 = vmatprep.subr.mxu0 0.0
        %315 = vmatpush1.msra.mxu0 0.0
        %316 = vmatprep.subr.mxu0 0.0
        %317 = vmatpush1.msra.mxu0 0.0
        %318 = vmatprep.subr.mxu0 0.0
        %319 = vmatpush1.msra.mxu0 0.0
        %320 = vmatprep.subr.mxu0 0.0
        %321 = vmatpush1.msra.mxu0 0.0
        %322 = vmatprep.subr.mxu0 0.0
        %323 = vmatpush1.msra.mxu0 0.0
        %324 = vmatprep.subr.mxu0 0.0
        %325 = vmatpush1.msra.mxu0 0.0
        %326 = vmatprep.subr.mxu0 0.0
        %327 = vmatpush1.msra.mxu0 0.0
        %328 = vmatprep.subr.mxu0 0.0
        %329 = vmatpush1.msra.mxu0 0.0
        %330 = vmatprep.subr.mxu0 0.0
        %331 = vmatpush1.msra.mxu0 0.0
        %332 = vmatprep.subr.mxu0 0.0
        %333 = vmatpush1.msra.mxu0 0.0
        %334 = vmatprep.subr.mxu0 0.0
        %335 = vmatpush1.msra.mxu0 0.0
        %336 = vmatprep.subr.mxu0 0.0
        %337 = vmatpush1.msra.mxu0 0.0
        %338 = vmatprep.subr.mxu0 0.0
        %339 = vmatpush1.msra.mxu0 0.0
        %340 = vmatprep.subr.mxu0 0.0
        %341 = vmatpush1.msra.mxu0 0.0
        %342 = vmatprep.subr.mxu0 0.0
        %343 = vmatpush1.msra.mxu0 0.0
        %344 = vmatprep.subr.mxu0 0.0
        %345 = vmatpush1.msra.mxu0 0.0
        %346 = vmatprep.subr.mxu0 0.0
        %347 = vmatpush1.msra.mxu0 0.0
        %348 = vmatprep.subr.mxu0 0.0
        %349 = vmatpush1.msra.mxu0 0.0
        %350 = vmatprep.subr.mxu0 0.0
        %351 = vmatpush1.msra.mxu0 0.0
        %352 = vmatprep.subr.mxu0 0.0
        %353 = vmatpush1.msra.mxu0 0.0
        %354 = vmatprep.subr.mxu0 0.0
        %355 = vmatpush1.msra.mxu0 0.0
        %356 = vmatprep.subr.mxu0 0.0
        %357 = vmatpush1.msra.mxu0 0.0
        %358 = vmatprep.subr.mxu0 0.0
        %359 = vmatpush1.msra.mxu0 0.0
        %360 = vmatprep.subr.mxu0 0.0
        %361 = vmatpush1.msra.mxu0 0.0
        %362 = vmatprep.subr.mxu0 0.0
        %363 = vmatpush1.msra.mxu0 0.0
        %364 = vmatprep.subr.mxu0 0.0
        %365 = vmatpush1.msra.mxu0 0.0
        %366 = vmatprep.subr.mxu0 0.0
        %367 = vmatpush1.msra.mxu0 0.0
        %368 = vmatprep.subr.mxu0 0.0
        %369 = vmatpush1.msra.mxu0 0.0
        %370 = vmatprep.mubr.f32.mxu0 0.0
        %371 = vmatmul.mubr.f32.gmra.mrb[0].mxu0 %v304
        %v372 = vpop.f32.mrb[0].mxu0
        %v373 = vadd.f32 0.0, %v372
        %v374 = vpop.f32.mrb[0].mxu0
        %375 = vdwg.mxu0
        %v376 = vld [vmem:[%s3] sm:$0x1]
        %v378 = vlaneseq
        %v379 = vshrl.u32 %v378, 7
        %v380 = vsub.s32 0, %v379
        %v381 = vrot.slane %v376, %v380
        %v383 = vadd.f32 %v298, %v381
        %v384 = vmul.f32 %v373, 2.0
        %v385 = vsub.f32 %v383, %v384
        %v386 = vlaneseq
        %v387 = vshrl.u32 %v386, 7
        %v388 = vstv %s284
        %v389 = vadd.s32 %v387, %v388
        %v390 = vlaneseq
        %v391 = vand.u32 %v390, 127
        %vm392 = vcmp.eq.s32.totalorder %v389, %v391
        %v393 = vsel %vm392, inf, %v385
        %vm394 = vcmask 130048
        %v395 = vsel %vm394, %v393, inf
        %396 = vmin.xlane.f32.xlu0 %v395
        %v397 = vpop.xlane.xlu0 %396
        %398 = vst.msk [vmem:[%s283] sm:$0xff] %vm293, %v397
        %v399 = vrot.slane %v395, 4
        %v400 = vmin.f32 %v395, %v399
        %v401 = vrot.slane %v400, 2
        %v402 = vmin.f32 %v400, %v401
        %v403 = vrot.slane %v402, 1
        %v404 = vmin.f32 %v402, %v403
        %vm405 = vcmask 122880
        %406 = vst.msk [vmem:[%s267] sm:$0x1] %vm405, %v404
        %p407 = scmp.lt.s32.totalorder %s21, 1
        %s408 = scalar_select %p407, %s21, 1
        %s409 = smul.addr %s408, 8
        %s410 = scalar_lea.vmem %s4, %s409
        %p411 = scmp.lt.s32.totalorder %s21, 1
        %s412 = scalar_select %p411, %s21, 1
        %s413 = smul.addr %s412, 8
        %s414 = scalar_lea.vmem %s5, %s413
        %s415 = sand.u32 %s175, 1
        %s416 = scalar_lea.sflag [#allocation3], %s415
        %s417 = sand.u32 %s175, 1
        %s418 = scalar_lea.vmem [#allocation2], %s417
        // Predicated region
        $region37: #{tpu_custom_call.1} parent=35 // pred_check
          %p419 = pneg %p133
        $region38: #{tpu_custom_call.1} parent=35 // pred_check_branch
          %421 = sbr.rel (%p419) target = $region40
        $region39: #{tpu_custom_call.1} parent=35 // pred_region
          _
        $region40: #{tpu_custom_call.1} parent=35 // pred_fallthru
          _
        // Predicated region
        $region41: #{tpu_custom_call.1} parent=35 // pred_check
          %p422 = pneg %p159
        $region42: #{tpu_custom_call.1} parent=35 // pred_check_branch
          %424 = sbr.rel (%p422) target = $region44
        $region43: #{tpu_custom_call.1} parent=35 // pred_region
          _
        $region44: #{tpu_custom_call.1} parent=35 // pred_fallthru
          _
        // Predicated region
        $region45: #{tpu_custom_call.1} parent=35 // pred_check
          %p425 = pneg %p185
        $region46: #{tpu_custom_call.1} parent=35 // pred_check_branch
          %427 = sbr.rel (%p425) target = $region48
        $region47: #{tpu_custom_call.1} parent=35 // pred_region
          %s429 = ssub.s32 16, 16
          %430 = vsyncadd %s416, %s429
          %s431 = smul.addr %s21, 16
          %s432 = scalar_lea.hbm %s6, %s431
          %s434 = sshll.u32 %s418, 4
          %s435 = int_to_ptr.vmem [resolvable:$true] %s434
          %437 = dma.vmem_to_hbm [thread:$0]  %s435, 16, %s432, %s416
        $region48: #{tpu_custom_call.1} parent=35 // pred_fallthru
          _
      $region36: #{tpu_custom_call.1} parent=5 // pred_fallthru
        _
      %p438 = scmp.le.s32.totalorder 2, %s16
      // Predicated region
      $region49: #{tpu_custom_call.1} parent=5 // pred_check
        %p439 = pneg %p438
      $region50: #{tpu_custom_call.1} parent=5 // pred_check_branch
        %441 = sbr.rel (%p439) target = $region52
      $region51: #{tpu_custom_call.1} parent=5 // pred_region
        %s442 = ssub.s32 %s16, 2
        // Predicated region
        $region53: #{tpu_custom_call.1} parent=51 // pred_check
          %p443 = pneg %p139
        $region54: #{tpu_custom_call.1} parent=51 // pred_check_branch
          %445 = sbr.rel (%p443) target = $region56
        $region55: #{tpu_custom_call.1} parent=51 // pred_region
          %p446 = scmp.lt.s32.totalorder %s22, 1
          %s447 = scalar_select %p446, %s22, 1
          %s448 = smul.addr %s447, 8
          %s449 = scalar_lea.vmem %s4, %s448
        $region56: #{tpu_custom_call.1} parent=51 // pred_fallthru
          _
        // Predicated region
        $region57: #{tpu_custom_call.1} parent=51 // pred_check
          %p450 = pneg %p165
        $region58: #{tpu_custom_call.1} parent=51 // pred_check_branch
          %452 = sbr.rel (%p450) target = $region60
        $region59: #{tpu_custom_call.1} parent=51 // pred_region
          %p453 = scmp.lt.s32.totalorder %s22, 1
          %s454 = scalar_select %p453, %s22, 1
          %s455 = smul.addr %s454, 8
          %s456 = scalar_lea.vmem %s5, %s455
        $region60: #{tpu_custom_call.1} parent=51 // pred_fallthru
          _
        // Predicated region
        $region61: #{tpu_custom_call.1} parent=51 // pred_check
          %p457 = pneg %p191
        $region62: #{tpu_custom_call.1} parent=51 // pred_check_branch
          %459 = sbr.rel (%p457) target = $region64
        $region63: #{tpu_custom_call.1} parent=51 // pred_region
          %s460 = sand.u32 %s176, 1
          %s461 = scalar_lea.sflag [#allocation3], %s460
          %s462 = sand.u32 %s176, 1
          %s463 = scalar_lea.vmem [#allocation2], %s462
          %464 = dma.done %s461, 16
        $region64: #{tpu_custom_call.1} parent=51 // pred_fallthru
          _
      $region52: #{tpu_custom_call.1} parent=5 // pred_fallthru
        _
    $region6: #{tpu_custom_call.1} parent=1 // loop_footer
      %s20 = sadd.s32 1, %s16
    $region7: #{tpu_custom_call.1} parent=1 // loop_footer_branch
      %15 = sbr.rel target = $region3
    $region8: #{tpu_custom_call.1} parent=1 // loop_exit
      _
    %465 = vsyncpa [#allocation3], 1
    %s466 = scalar_lea.sflag [#allocation3], 1
    %467 = vsyncpa %s466, 1

// kernel: tpu_custom_call.1
$region0: #{tpu_custom_call.1}
  #allocation0 [shape = 'u32[]', space=smem, size = 0x4, offset = 0x4, fixed_abs, tag = 'smem constant byte address 0x4 - core index']
  #allocation1 [shape = 'u32[144,128]{1,0:T(1,128)}', space=vmem, size = 0x12000, scoped, tag = 'internal scratch']
  %s0 = inlined_call_operand.vmem [shape: f32[16,32], index: 0, kind: input, shape index: {}]
  %s1 = inlined_call_operand.vmem [shape: f32[16,32], index: 1, kind: input, shape index: {}]
  %s2 = inlined_call_operand.vmem [shape: f32[32,16], index: 2, kind: input, shape index: {}]
  %s3 = inlined_call_operand.vmem [shape: f32[1,16], index: 3, kind: input, shape index: {}]
  %s4 = inlined_call_operand.vmem [shape: f32[2,8,1], index: 4, kind: output, shape index: {0}]
  %s5 = inlined_call_operand.vmem [shape: f32[2,8,1], index: 5, kind: output, shape index: {1}]
  %s6 = inlined_call_operand.hbm [shape: f32[2,1,16], index: 6, kind: output, shape index: {2}]
  %7 = xla_tuple %s4, %s5, %s6
  %s8 = sld [smem:[#allocation0]]
  $region65: #{tpu_custom_call.1} parent=0
    _
  %s10 = ssub.s32 1, %s8
  %s11 = scalar_select 0, %s10, %s8
  $region1: #{tpu_custom_call.1} parent=0
    #allocation2 [shape = 'u8[1024]{0}', space=vmem, size = 0x400, scoped, tag = 'output window, operand 2']
    #allocation3 [shape = 's32[2]{0}', space=sflag, size = 0x8, scoped, tag = 'scoped memory for tpu_custom_call.1']
    %12 = vsyncpa [#allocation3], 0
    %s13 = scalar_lea.sflag [#allocation3], 1
    %14 = vsyncpa %s13, 0
    loop: start=0, step=1, limit=4
    $region2: #{tpu_custom_call.1} parent=1 // loop_pre_header
      _
    $region3: #{tpu_custom_call.1} parent=1 // loop_header
      %s16 = sphi 0, %s20
      %p17 = scmp.ge.s32.totalorder %s16, 4
      %s26 = sphi 0, %s28
      %s29 = sphi 0, %s26
      %s30 = sphi 0, %s29
      %s46 = sphi 0, %s30
      %s52 = sphi 0, %s54
      %s55 = sphi 0, %s52
      %s56 = sphi 0, %s55
      %s72 = sphi 0, %s56
      %s76 = sphi 0, %s76
      %s78 = sphi 0, %s76
      %s79 = sphi 0, %s78
      %s93 = sphi 0, %s79
      %s97 = sphi 0, %s97
      %s99 = sphi 0, %s97
      %s100 = sphi 0, %s99
      %s114 = sphi 0, %s100
      %s120 = sphi 0, %s122
      %s123 = sphi 0, %s120
      %s124 = sphi 0, %s123
      %s140 = sphi 0, %s124
      %s146 = sphi 0, %s148
      %s149 = sphi 0, %s146
      %s150 = sphi 0, %s149
      %s166 = sphi 0, %s150
      %s172 = sphi 0, %s174
      %s175 = sphi 0, %s172
      %s176 = sphi 0, %s175
      %s192 = sphi 0, %s176
    $region4: #{tpu_custom_call.1} parent=1 // loop_header_branch
      %19 = sbr.rel (%p17) target = $region8
    $region5: #{tpu_custom_call.1} parent=1 // loop_body
      %s21 = ssub.s32 %s16, 1
      %s22 = ssub.s32 %s16, 2
      %s23 = sadd.s32 %s16, 1
      %s24 = ssub.s32 %s16, %s23
      %p25 = scmp.eq.s32.totalorder %s24, 0
      %s27 = sadd.s32 %s26, 1
      %s28 = scalar_select %p25, %s26, %s27
      %p31 = pneg %p25
      %p32 = scmp.eq.s32.totalorder %s16, 1
      %p33 = por %p31, %p32
      %p34 = scmp.ne.s32.totalorder %s26, %s29
      %p35 = scmp.eq.s32.totalorder %s16, 0
      %p36 = por %p34, %p35
      %p37 = scmp.ne.s32.totalorder %s26, %s29
      %p38 = scmp.eq.s32.totalorder %s21, 1
      %p39 = por %p37, %p38
      %p40 = scmp.ne.s32.totalorder %s29, %s30
      %p41 = scmp.eq.s32.totalorder %s21, 0
      %p42 = por %p40, %p41
      %p43 = scmp.ne.s32.totalorder %s29, %s30
      %p44 = scmp.eq.s32.totalorder %s22, 1
      %p45 = por %p43, %p44
      %p47 = scmp.ne.s32.totalorder %s30, %s46
      %p48 = scmp.eq.s32.totalorder %s22, 0
      %p49 = por %p47, %p48
      %s50 = ssub.s32 %s16, %s23
      %p51 = scmp.eq.s32.totalorder %s50, 0
      %s53 = sadd.s32 %s52, 1
      %s54 = scalar_select %p51, %s52, %s53
      %p57 = pneg %p51
      %p58 = scmp.eq.s32.totalorder %s16, 1
      %p59 = por %p57, %p58
      %p60 = scmp.ne.s32.totalorder %s52, %s55
      %p61 = scmp.eq.s32.totalorder %s16, 0
      %p62 = por %p60, %p61
      %p63 = scmp.ne.s32.totalorder %s52, %s55
      %p64 = scmp.eq.s32.totalorder %s21, 1
      %p65 = por %p63, %p64
      %p66 = scmp.ne.s32.totalorder %s55, %s56
      %p67 = scmp.eq.s32.totalorder %s21, 0
      %p68 = por %p66, %p67
      %p69 = scmp.ne.s32.totalorder %s55, %s56
      %p70 = scmp.eq.s32.totalorder %s22, 1
      %p71 = por %p69, %p70
      %p73 = scmp.ne.s32.totalorder %s56, %s72
      %p74 = scmp.eq.s32.totalorder %s22, 0
      %p75 = por %p73, %p74
      %s77 = sadd.s32 %s76, 1
      %p80 = scmp.eq.s32.totalorder %s16, 1
      %p81 = scmp.ne.s32.totalorder %s76, %s78
      %p82 = scmp.eq.s32.totalorder %s16, 0
      %p83 = por %p81, %p82
      %p84 = scmp.ne.s32.totalorder %s76, %s78
      %p85 = scmp.eq.s32.totalorder %s21, 1
      %p86 = por %p84, %p85
      %p87 = scmp.ne.s32.totalorder %s78, %s79
      %p88 = scmp.eq.s32.totalorder %s21, 0
      %p89 = por %p87, %p88
      %p90 = scmp.ne.s32.totalorder %s78, %s79
      %p91 = scmp.eq.s32.totalorder %s22, 1
      %p92 = por %p90, %p91
      %p94 = scmp.ne.s32.totalorder %s79, %s93
      %p95 = scmp.eq.s32.totalorder %s22, 0
      %p96 = por %p94, %p95
      %s98 = sadd.s32 %s97, 1
      %p101 = scmp.eq.s32.totalorder %s16, 1
      %p102 = scmp.ne.s32.totalorder %s97, %s99
      %p103 = scmp.eq.s32.totalorder %s16, 0
      %p104 = por %p102, %p103
      %p105 = scmp.ne.s32.totalorder %s97, %s99
      %p106 = scmp.eq.s32.totalorder %s21, 1
      %p107 = por %p105, %p106
      %p108 = scmp.ne.s32.totalorder %s99, %s100
      %p109 = scmp.eq.s32.totalorder %s21, 0
      %p110 = por %p108, %p109
      %p111 = scmp.ne.s32.totalorder %s99, %s100
      %p112 = scmp.eq.s32.totalorder %s22, 1
      %p113 = por %p111, %p112
      %p115 = scmp.ne.s32.totalorder %s100, %s114
      %p116 = scmp.eq.s32.totalorder %s22, 0
      %p117 = por %p115, %p116
      %s118 = ssub.s32 %s16, %s23
      %p119 = scmp.eq.s32.totalorder %s118, 0
      %s121 = sadd.s32 %s120, 1
      %s122 = scalar_select %p119, %s120, %s121
      %p125 = pneg %p119
      %p126 = scmp.eq.s32.totalorder %s16, 1
      %p127 = por %p125, %p126
      %p128 = scmp.ne.s32.totalorder %s120, %s123
      %p129 = scmp.eq.s32.totalorder %s16, 0
      %p130 = por %p128, %p129
      %p131 = scmp.ne.s32.totalorder %s120, %s123
      %p132 = scmp.eq.s32.totalorder %s21, 1
      %p133 = por %p131, %p132
      %p134 = scmp.ne.s32.totalorder %s123, %s124
      %p135 = scmp.eq.s32.totalorder %s21, 0
      %p136 = por %p134, %p135
      %p137 = scmp.ne.s32.totalorder %s123, %s124
      %p138 = scmp.eq.s32.totalorder %s22, 1
      %p139 = por %p137, %p138
      %p141 = scmp.ne.s32.totalorder %s124, %s140
      %p142 = scmp.eq.s32.totalorder %s22, 0
      %p143 = por %p141, %p142
      %s144 = ssub.s32 %s16, %s23
      %p145 = scmp.eq.s32.totalorder %s144, 0
      %s147 = sadd.s32 %s146, 1
      %s148 = scalar_select %p145, %s146, %s147
      %p151 = pneg %p145
      %p152 = scmp.eq.s32.totalorder %s16, 1
      %p153 = por %p151, %p152
      %p154 = scmp.ne.s32.totalorder %s146, %s149
      %p155 = scmp.eq.s32.totalorder %s16, 0
      %p156 = por %p154, %p155
      %p157 = scmp.ne.s32.totalorder %s146, %s149
      %p158 = scmp.eq.s32.totalorder %s21, 1
      %p159 = por %p157, %p158
      %p160 = scmp.ne.s32.totalorder %s149, %s150
      %p161 = scmp.eq.s32.totalorder %s21, 0
      %p162 = por %p160, %p161
      %p163 = scmp.ne.s32.totalorder %s149, %s150
      %p164 = scmp.eq.s32.totalorder %s22, 1
      %p165 = por %p163, %p164
      %p167 = scmp.ne.s32.totalorder %s150, %s166
      %p168 = scmp.eq.s32.totalorder %s22, 0
      %p169 = por %p167, %p168
      %s170 = ssub.s32 %s16, %s23
      %p171 = scmp.eq.s32.totalorder %s170, 0
      %s173 = sadd.s32 %s172, 1
      %s174 = scalar_select %p171, %s172, %s173
      %p177 = pneg %p171
      %p178 = scmp.eq.s32.totalorder %s16, 1
      %p179 = por %p177, %p178
      %p180 = scmp.ne.s32.totalorder %s172, %s175
      %p181 = scmp.eq.s32.totalorder %s16, 0
      %p182 = por %p180, %p181
      %p183 = scmp.ne.s32.totalorder %s172, %s175
      %p184 = scmp.eq.s32.totalorder %s21, 1
      %p185 = por %p183, %p184
      %p186 = scmp.ne.s32.totalorder %s175, %s176
      %p187 = scmp.eq.s32.totalorder %s21, 0
      %p188 = por %p186, %p187
      %p189 = scmp.ne.s32.totalorder %s175, %s176
      %p190 = scmp.eq.s32.totalorder %s22, 1
      %p191 = por %p189, %p190
      %p193 = scmp.ne.s32.totalorder %s176, %s192
      %p194 = scmp.eq.s32.totalorder %s22, 0
      %p195 = por %p193, %p194
      %p196 = scmp.le.s32.totalorder 1, %s16
      %p197 = scmp.lt.s32.totalorder %s16, 3
      %p198 = pnand %p196, %p197
      %p199 = pneg %p198
      // Predicated region
      $region9: #{tpu_custom_call.1} parent=5 // pred_check
        _
      $region10: #{tpu_custom_call.1} parent=5 // pred_check_branch
        %201 = sbr.rel (%p198) target = $region12
      $region11: #{tpu_custom_call.1} parent=5 // pred_region
        %s202 = ssub.s32 %s16, 1
        // Predicated region
        $region13: #{tpu_custom_call.1} parent=11 // pred_check
          %p203 = pneg %p89
        $region14: #{tpu_custom_call.1} parent=11 // pred_check_branch
          %205 = sbr.rel (%p203) target = $region16
        $region15: #{tpu_custom_call.1} parent=11 // pred_region
          _
        $region16: #{tpu_custom_call.1} parent=11 // pred_fallthru
          _
        // Predicated region
        $region17: #{tpu_custom_call.1} parent=11 // pred_check
          %p206 = pneg %p110
        $region18: #{tpu_custom_call.1} parent=11 // pred_check_branch
          %208 = sbr.rel (%p206) target = $region20
        $region19: #{tpu_custom_call.1} parent=11 // pred_region
          _
        $region20: #{tpu_custom_call.1} parent=11 // pred_fallthru
          _
      $region12: #{tpu_custom_call.1} parent=5 // pred_fallthru
        _
      %p209 = scmp.lt.s32.totalorder %s16, 2
      // Predicated region
      $region21: #{tpu_custom_call.1} parent=5 // pred_check
        %p210 = pneg %p209
      $region22: #{tpu_custom_call.1} parent=5 // pred_check_branch
        %212 = sbr.rel (%p210) target = $region24
      $region23: #{tpu_custom_call.1} parent=5 // pred_region
        // Predicated region
        $region25: #{tpu_custom_call.1} parent=23 // pred_check
          %p213 = pneg %p36
        $region26: #{tpu_custom_call.1} parent=23 // pred_check_branch
          %215 = sbr.rel (%p213) target = $region28
        $region27: #{tpu_custom_call.1} parent=23 // pred_region
          %p216 = scmp.lt.s32.totalorder %s16, 1
          %s217 = scalar_select %p216, %s16, 1
          %s218 = smul.addr %s217, 8
          %s219 = scalar_lea.vmem %s0, %s218
        $region28: #{tpu_custom_call.1} parent=23 // pred_fallthru
          _
        // Predicated region
        $region29: #{tpu_custom_call.1} parent=23 // pred_check
          %p220 = pneg %p62
        $region30: #{tpu_custom_call.1} parent=23 // pred_check_branch
          %222 = sbr.rel (%p220) target = $region32
        $region31: #{tpu_custom_call.1} parent=23 // pred_region
          %p223 = scmp.lt.s32.totalorder %s16, 1
          %s224 = scalar_select %p223, %s16, 1
          %s225 = smul.addr %s224, 8
          %s226 = scalar_lea.vmem %s1, %s225
        $region32: #{tpu_custom_call.1} parent=23 // pred_fallthru
          _
      $region24: #{tpu_custom_call.1} parent=5 // pred_fallthru
        _
      %p227 = scmp.le.s32.totalorder 1, %s16
      %p228 = scmp.lt.s32.totalorder %s16, 3
      %p229 = pnand %p227, %p228
      %p230 = pneg %p229
      // Predicated region
      $region33: #{tpu_custom_call.1} parent=5 // pred_check
        _
      $region34: #{tpu_custom_call.1} parent=5 // pred_check_branch
        %232 = sbr.rel (%p229) target = $region36
      $region35: #{tpu_custom_call.1} parent=5 // pred_region
        %s233 = ssub.s32 %s16, 1
        %p234 = scmp.lt.s32.totalorder %s21, 1
        %s235 = scalar_select %p234, %s21, 1
        %s236 = smul.addr %s235, 8
        %s237 = scalar_lea.vmem %s0, %s236
        %p238 = pneg %p42
        %p239 = pneg %p39
        %p240 = scmp.lt.s32.totalorder %s21, 1
        %s241 = scalar_select %p240, %s21, 1
        %s242 = smul.addr %s241, 8
        %s243 = scalar_lea.vmem %s1, %s242
        %p244 = pneg %p68
        %p245 = pneg %p65
        %p246 = pneg %p89
        %p247 = pneg %p86
        %p248 = pneg %p110
        %p249 = pneg %p107
        %p250 = pneg %p136
        %p251 = pneg %p133
        %p252 = scmp.lt.s32.totalorder %s21, 1
        %s253 = scalar_select %p252, %s21, 1
        %s254 = smul.addr %s253, 8
        %s255 = scalar_lea.vmem %s4, %s254
        %p256 = pneg %p162
        %p257 = pneg %p159
        %p258 = scmp.lt.s32.totalorder %s21, 1
        %s259 = scalar_select %p258, %s21, 1
        %s260 = smul.addr %s259, 8
        %s261 = scalar_lea.vmem %s5, %s260
        %p262 = pneg %p188
        %p263 = pneg %p185
        %s264 = sand.u32 %s175, 1
        %s265 = scalar_lea.sflag [#allocation3], %s264
        %s266 = sand.u32 %s175, 1
        %s267 = scalar_lea.vmem [#allocation2], %s266
        %p268 = scmp.lt.s32.totalorder %s21, 1
        %s269 = scalar_select %p268, %s21, 1
        %s270 = smul.addr %s269, 8
        %s271 = scalar_lea.vmem %s0, %s270
        %p272 = scmp.lt.s32.totalorder %s21, 1
        %s273 = scalar_select %p272, %s21, 1
        %s274 = smul.addr %s273, 8
        %s275 = scalar_lea.vmem %s1, %s274
        %p276 = scmp.lt.s32.totalorder %s21, 1
        %s277 = scalar_select %p276, %s21, 1
        %s278 = smul.addr %s277, 8
        %s279 = scalar_lea.vmem %s4, %s278
        %p280 = scmp.lt.s32.totalorder %s21, 1
        %s281 = scalar_select %p280, %s21, 1
        %s282 = smul.addr %s281, 8
        %s283 = scalar_lea.vmem %s5, %s282
        %s284 = smul.u32 %s21, 8
        %v285 = vld [vmem:[%s271] sm:$0xff]
        %v286 = vld [vmem:[%s275] sm:$0xff]
        %v287 = vsub.f32 %v285, %v286
        %v288 = vmul.f32 %v287, %v287
        %vm289 = vcmask 261120
        %v290 = vsel %vm289, %v288, 0.0
        %291 = vadd.xlane.f32.xlu0 %v290
        %v292 = vpop.xlane.xlu0 %291
        %vm293 = vcmask 7168
        %294 = vst.msk [vmem:[%s279] sm:$0xff] %vm293, %v292
        %v295 = vmul.f32 %v285, %v285
        %v296 = vsel %vm289, %v295, 0.0
        %297 = vadd.xlane.f32.xlu0 %v296
        %v298 = vpop.xlane.xlu0 %297
        %v299 = vld [vmem:[%s2] sm:$0xff]
        %v300 = vld [vmem:[%s2 + $0x8] sm:$0xff]
        %v301 = vld [vmem:[%s2 + $0x10] sm:$0xff]
        %v302 = vld [vmem:[%s2 + $0x18] sm:$0xff]
        %v304 = vsel %vm289, %v285, 0
        %306 = vmatprep.subr.mxu0 0.0
        %307 = vmatpush1.msra.mxu0 %v299
        %308 = vmatprep.subr.mxu0 0.0
        %309 = vmatpush1.msra.mxu0 %v300
        %310 = vmatprep.subr.mxu0 0.0
        %311 = vmatpush1.msra.mxu0 %v301
        %312 = vmatprep.subr.mxu0 0.0
        %313 = vmatpush1.msra.mxu0 %v302
        %314 = vmatprep.subr.mxu0 0.0
        %315 = vmatpush1.msra.mxu0 0.0
        %316 = vmatprep.subr.mxu0 0.0
        %317 = vmatpush1.msra.mxu0 0.0
        %318 = vmatprep.subr.mxu0 0.0
        %319 = vmatpush1.msra.mxu0 0.0
        %320 = vmatprep.subr.mxu0 0.0
        %321 = vmatpush1.msra.mxu0 0.0
        %322 = vmatprep.subr.mxu0 0.0
        %323 = vmatpush1.msra.mxu0 0.0
        %324 = vmatprep.subr.mxu0 0.0
        %325 = vmatpush1.msra.mxu0 0.0
        %326 = vmatprep.subr.mxu0 0.0
        %327 = vmatpush1.msra.mxu0 0.0
        %328 = vmatprep.subr.mxu0 0.0
        %329 = vmatpush1.msra.mxu0 0.0
        %330 = vmatprep.subr.mxu0 0.0
        %331 = vmatpush1.msra.mxu0 0.0
        %332 = vmatprep.subr.mxu0 0.0
        %333 = vmatpush1.msra.mxu0 0.0
        %334 = vmatprep.subr.mxu0 0.0
        %335 = vmatpush1.msra.mxu0 0.0
        %336 = vmatprep.subr.mxu0 0.0
        %337 = vmatpush1.msra.mxu0 0.0
        %338 = vmatprep.subr.mxu0 0.0
        %339 = vmatpush1.msra.mxu0 0.0
        %340 = vmatprep.subr.mxu0 0.0
        %341 = vmatpush1.msra.mxu0 0.0
        %342 = vmatprep.subr.mxu0 0.0
        %343 = vmatpush1.msra.mxu0 0.0
        %344 = vmatprep.subr.mxu0 0.0
        %345 = vmatpush1.msra.mxu0 0.0
        %346 = vmatprep.subr.mxu0 0.0
        %347 = vmatpush1.msra.mxu0 0.0
        %348 = vmatprep.subr.mxu0 0.0
        %349 = vmatpush1.msra.mxu0 0.0
        %350 = vmatprep.subr.mxu0 0.0
        %351 = vmatpush1.msra.mxu0 0.0
        %352 = vmatprep.subr.mxu0 0.0
        %353 = vmatpush1.msra.mxu0 0.0
        %354 = vmatprep.subr.mxu0 0.0
        %355 = vmatpush1.msra.mxu0 0.0
        %356 = vmatprep.subr.mxu0 0.0
        %357 = vmatpush1.msra.mxu0 0.0
        %358 = vmatprep.subr.mxu0 0.0
        %359 = vmatpush1.msra.mxu0 0.0
        %360 = vmatprep.subr.mxu0 0.0
        %361 = vmatpush1.msra.mxu0 0.0
        %362 = vmatprep.subr.mxu0 0.0
        %363 = vmatpush1.msra.mxu0 0.0
        %364 = vmatprep.subr.mxu0 0.0
        %365 = vmatpush1.msra.mxu0 0.0
        %366 = vmatprep.subr.mxu0 0.0
        %367 = vmatpush1.msra.mxu0 0.0
        %368 = vmatprep.subr.mxu0 0.0
        %369 = vmatpush1.msra.mxu0 0.0
        %370 = vmatprep.mubr.f32.mxu0 0.0
        %371 = vmatmul.mubr.f32.gmra.mrb[0].mxu0 %v304
        %v372 = vpop.f32.mrb[0].mxu0
        %v373 = vadd.f32 0.0, %v372
        %v374 = vpop.f32.mrb[0].mxu0
        %375 = vdwg.mxu0
        %v376 = vld [vmem:[%s3] sm:$0x1]
        %v378 = vlaneseq
        %v379 = vshrl.u32 %v378, 7
        %v380 = vsub.s32 0, %v379
        %v381 = vrot.slane %v376, %v380
        %v383 = vadd.f32 %v298, %v381
        %v384 = vmul.f32 %v373, 2.0
        %v385 = vsub.f32 %v383, %v384
        %v386 = vlaneseq
        %v387 = vshrl.u32 %v386, 7
        %v388 = vstv %s284
        %v389 = vadd.s32 %v387, %v388
        %v390 = vlaneseq
        %v391 = vand.u32 %v390, 127
        %vm392 = vcmp.eq.s32.totalorder %v389, %v391
        %v393 = vsel %vm392, inf, %v385
        %vm394 = vcmask 130048
        %v395 = vsel %vm394, %v393, inf
        %396 = vmin.xlane.f32.xlu0 %v395
        %v397 = vpop.xlane.xlu0 %396
        %398 = vst.msk [vmem:[%s283] sm:$0xff] %vm293, %v397
        %v399 = vrot.slane %v395, 4
        %v400 = vmin.f32 %v395, %v399
        %v401 = vrot.slane %v400, 2
        %v402 = vmin.f32 %v400, %v401
        %v403 = vrot.slane %v402, 1
        %v404 = vmin.f32 %v402, %v403
        %vm405 = vcmask 122880
        %406 = vst.msk [vmem:[%s267] sm:$0x1] %vm405, %v404
        %p407 = scmp.lt.s32.totalorder %s21, 1
        %s408 = scalar_select %p407, %s21, 1
        %s409 = smul.addr %s408, 8
        %s410 = scalar_lea.vmem %s4, %s409
        %p411 = scmp.lt.s32.totalorder %s21, 1
        %s412 = scalar_select %p411, %s21, 1
        %s413 = smul.addr %s412, 8
        %s414 = scalar_lea.vmem %s5, %s413
        %s415 = sand.u32 %s175, 1
        %s416 = scalar_lea.sflag [#allocation3], %s415
        %s417 = sand.u32 %s175, 1
        %s418 = scalar_lea.vmem [#allocation2], %s417
        // Predicated region
        $region37: #{tpu_custom_call.1} parent=35 // pred_check
          %p419 = pneg %p133
        $region38: #{tpu_custom_call.1} parent=35 // pred_check_branch
          %421 = sbr.rel (%p419) target = $region40
        $region39: #{tpu_custom_call.1} parent=35 // pred_region
          _
        $region40: #{tpu_custom_call.1} parent=35 // pred_fallthru
          _
        // Predicated region
        $region41: #{tpu_custom_call.1} parent=35 // pred_check
          %p422 = pneg %p159
        $region42: #{tpu_custom_call.1} parent=35 // pred_check_branch
          %424 = sbr.rel (%p422) target = $region44
        $region43: #{tpu_custom_call.1} parent=35 // pred_region
          _
        $region44: #{tpu_custom_call.1} parent=35 // pred_fallthru
          _
        // Predicated region
        $region45: #{tpu_custom_call.1} parent=35 // pred_check
          %p425 = pneg %p185
        $region46: #{tpu_custom_call.1} parent=35 // pred_check_branch
          %427 = sbr.rel (%p425) target = $region48
        $region47: #{tpu_custom_call.1} parent=35 // pred_region
          %s429 = ssub.s32 16, 16
          %430 = vsyncadd %s416, %s429
          %s431 = smul.addr %s21, 16
          %s432 = scalar_lea.hbm %s6, %s431
          %s434 = sshll.u32 %s418, 4
          %s435 = int_to_ptr.vmem [resolvable:$true] %s434
          %437 = dma.vmem_to_hbm [thread:$0]  %s435, 16, %s432, %s416
        $region48: #{tpu_custom_call.1} parent=35 // pred_fallthru
          _
      $region36: #{tpu_custom_call.1} parent=5 // pred_fallthru
        _
      %p438 = scmp.le.s32.totalorder 2, %s16
      // Predicated region
      $region49: #{tpu_custom_call.1} parent=5 // pred_check
        %p439 = pneg %p438
      $region50: #{tpu_custom_call.1} parent=5 // pred_check_branch
        %441 = sbr.rel (%p439) target = $region52
      $region51: #{tpu_custom_call.1} parent=5 // pred_region
        %s442 = ssub.s32 %s16, 2
        // Predicated region
        $region53: #{tpu_custom_call.1} parent=51 // pred_check
          %p443 = pneg %p139
        $region54: #{tpu_custom_call.1} parent=51 // pred_check_branch
          %445 = sbr.rel (%p443) target = $region56
        $region55: #{tpu_custom_call.1} parent=51 // pred_region
          %p446 = scmp.lt.s32.totalorder %s22, 1
          %s447 = scalar_select %p446, %s22, 1
          %s448 = smul.addr %s447, 8
          %s449 = scalar_lea.vmem %s4, %s448
        $region56: #{tpu_custom_call.1} parent=51 // pred_fallthru
          _
        // Predicated region
        $region57: #{tpu_custom_call.1} parent=51 // pred_check
          %p450 = pneg %p165
        $region58: #{tpu_custom_call.1} parent=51 // pred_check_branch
          %452 = sbr.rel (%p450) target = $region60
        $region59: #{tpu_custom_call.1} parent=51 // pred_region
          %p453 = scmp.lt.s32.totalorder %s22, 1
          %s454 = scalar_select %p453, %s22, 1
          %s455 = smul.addr %s454, 8
          %s456 = scalar_lea.vmem %s5, %s455
        $region60: #{tpu_custom_call.1} parent=51 // pred_fallthru
          _
        // Predicated region
        $region61: #{tpu_custom_call.1} parent=51 // pred_check
          %p457 = pneg %p191
        $region62: #{tpu_custom_call.1} parent=51 // pred_check_branch
          %459 = sbr.rel (%p457) target = $region64
        $region63: #{tpu_custom_call.1} parent=51 // pred_region
          %s460 = sand.u32 %s176, 1
          %s461 = scalar_lea.sflag [#allocation3], %s460
          %s462 = sand.u32 %s176, 1
          %s463 = scalar_lea.vmem [#allocation2], %s462
          %464 = dma.done %s461, 16
        $region64: #{tpu_custom_call.1} parent=51 // pred_fallthru
          _
      $region52: #{tpu_custom_call.1} parent=5 // pred_fallthru
        _
    $region6: #{tpu_custom_call.1} parent=1 // loop_footer
      %s20 = sadd.s32 1, %s16
    $region7: #{tpu_custom_call.1} parent=1 // loop_footer_branch
      %15 = sbr.rel target = $region3
    $region8: #{tpu_custom_call.1} parent=1 // loop_exit
      _
    %465 = vsyncpa [#allocation3], 1
    %s466 = scalar_lea.sflag [#allocation3], 1
    %467 = vsyncpa %s466, 1

</llo_original>
